<compile_context>
chip_gen: v7x
topology: tpu7x:2x2x1
jax: 0.10.0
libtpu: 0.0.40
codegen_flags: <defaults>
</compile_context>

<pallas_src>
import functools

import jax
import jax.numpy as jnp
from jax import lax
from jax.experimental import pallas as pl
from jax.experimental.pallas import tpu as pltpu

LANES = 128
CHUNK_ROWS = 512                 # in-kernel reduction chunk (f32 temps ~256 KiB each)
SMALL_INPUT_ELEMS = 128 * 1024   # below ~one tile, fused XLA reductions win


def _round_up(x, m):
    return ((x + m - 1) // m) * m


def _max_tile_rows(dtype):
    # ~2 MiB per input tile (same HBM bytes per grid step for both dtypes).
    return 8192 if dtype == jnp.bfloat16 else 4096


@functools.lru_cache(maxsize=None)
def _num_tensorcores():
    """Best-effort TensorCores-per-chip query; defaults to 1 (always safe)."""
    try:
        info = pltpu.get_tpu_info()
    except Exception:
        return 1
    for name in ("num_tensorcores", "tensorcores_per_chip", "tensor_core_count",
                 "num_cores", "cores_per_chip", "core_count"):
        n = getattr(info, name, None)
        if isinstance(n, int) and 1 <= n <= 2:
            return n
    return 1


def _plan(rows, row_align, tm_max, req_cores):
    """Pick (num_cores, tiles_per_core, tm, chunk).

    Invariants: num_cores * tiles_per_core == cdiv(rows, tm)  (no idle grid
    steps / dead re-DMA), tm % chunk == 0, chunk % row_align == 0.
    """
    if req_cores > 1 and rows > CHUNK_ROWS:
        tiles_per_core = pl.cdiv(rows, req_cores * tm_max)
        tm = min(tm_max,
                 _round_up(pl.cdiv(rows, req_cores * tiles_per_core), CHUNK_ROWS))
        if pl.cdiv(rows, tm) == req_cores * tiles_per_core:
            return req_cores, tiles_per_core, tm, CHUNK_ROWS
    if rows >= CHUNK_ROWS:
        tm = min(tm_max, _round_up(rows, CHUNK_ROWS))
        return 1, pl.cdiv(rows, tm), tm, CHUNK_ROWS
    tm = _round_up(rows, row_align)
    return 1, 1, tm, tm


def _mixed_loss_kernel(pred_ref, true_ref, out_ref, *, tm, chunk, n_rows,
                       tiles_per_core, total_tiles, needs_mask):
    """Per-core partials, resident (1, 4, 8, 128) output block.

    out_ref[0, 0] : sum of mask                     (count of |true| > 0.5)
    out_ref[0, 1] : sum of  mask * (p - t)^2        (masked squared-error sum)
    out_ref[0, 2] : sum of ~mask * (p - t)^2        (unmasked squared-error sum)
    out_ref[0, 3] : max of (p - t)^2
    """
    c = pl.program_id(0)   # core axis
    i = pl.program_id(1)   # sequential reduction axis

    @pl.when(i == 0)
    def _():
        out_ref[...] = jnp.zeros_like(out_ref)

    n_chunks = tm // chunk
    csub = chunk // 8

    def fsum(x):  # (chunk, 128) -> (8, 128): pure elementwise VPU adds
        return jnp.sum(x.reshape(csub, 8, LANES), axis=0)

    def fmax(x):
        return jnp.max(x.reshape(csub, 8, LANES), axis=0)

    def accum_chunk(j, masked):
        off = j * chunk
        if not isinstance(off, int):
            off = pl.multiple_of(off, chunk)
        p_nat = pred_ref[pl.ds(off, chunk), :]
        t_nat = true_ref[pl.ds(off, chunk), :]
        # Mask compare on the native dtype (bf16 stays packed on bf16 VPUs).
        mask = jnp.abs(t_nat) > jnp.asarray(0.5, dtype=t_nat.dtype)
        d = p_nat.astype(jnp.float32) - t_nat.astype(jnp.float32)
        sq = d * d
        if masked:
            # Only the single boundary tile pays for this path (see pl.when).
            tile = c * tiles_per_core + i
            row_ids = (tile * tm + off
                       + lax.broadcasted_iota(jnp.int32, (chunk, LANES), 0))
            valid = row_ids < n_rows
            mask = jnp.logical_and(mask, valid)
            sq = jnp.where(valid, sq, 0.0)
        out_ref[0, 0] += fsum(jnp.where(mask, 1.0, 0.0))
        out_ref[0, 1] += fsum(jnp.where(mask, sq, 0.0))
        out_ref[0, 2] += fsum(jnp.where(mask, 0.0, sq))
        out_ref[0, 3] = jnp.maximum(out_ref[0, 3], fmax(sq))

    def run(masked):
        if n_chunks == 1:
            accum_chunk(0, masked)
        else:
            @pl.loop(0, n_chunks)
            def _(j):
                accum_chunk(j, masked)

    if needs_mask:
        is_tail = (c * tiles_per_core + i) == (total_tiles - 1)

        @pl.when(jnp.logical_not(is_tail))
        def _():
            run(masked=False)          # hot path: no iota / compare / selects

        @pl.when(is_tail)
        def _():
            run(masked=True)           # boundary tile only
    else:
        run(masked=False)


def _combine(cnt, sum_sq_m, sum_sq_u, max_sq, n_elems):
    """Final scalar combination, matching MixedLoss.forward semantics."""
    n_f = jnp.float32(n_elems)
    cnt_safe = jnp.maximum(cnt, 1.0)          # guard 0/0 in unselected branch
    rest_safe = jnp.maximum(n_f - cnt, 1.0)

    # Branch A: count(|true| > 0.5) > 200
    loss1_a = jnp.sqrt(sum_sq_m / cnt_safe)
    loss2_a = jnp.sqrt(sum_sq_u / rest_safe)
    branch_a = 0.7 * loss1_a + 0.3 * loss2_a

    # Branch B: otherwise
    loss1_b = jnp.sqrt((sum_sq_m + sum_sq_u) / n_f)
    loss2_b = jnp.sqrt(max_sq)                # == max |pred - true|
    branch_b = 0.7 * loss1_b + 0.3 * loss2_b

    return jnp.where(cnt > 200.0, branch_a, branch_b)


def _mixed_loss_small(pred, true):
    """Fused pure-JAX path for small inputs (kernel fixed cost dominates)."""
    p = pred.astype(jnp.float32)
    t = true.astype(jnp.float32)
    mask = jnp.abs(t) > 0.5
    sq = jnp.square(p - t)
    cnt = jnp.sum(mask.astype(jnp.float32))
    sum_sq_m = jnp.sum(jnp.where(mask, sq, 0.0))
    sum_sq_u = jnp.sum(jnp.where(mask, 0.0, sq))
    return _combine(cnt, sum_sq_m, sum_sq_u, jnp.max(sq), pred.size)


def _mixed_loss_pallas(pred, true):
    n_elems = pred.size

    # Stream in the native dtype when possible (bf16 halves HBM bytes).
    if pred.dtype == jnp.bfloat16 and true.dtype == jnp.bfloat16:
        dtype, row_align = jnp.bfloat16, 16
    else:
        dtype, row_align = jnp.float32, 8

    p_flat = jnp.ravel(pred).astype(dtype)
    t_flat = jnp.ravel(true).astype(dtype)

    rows = pl.cdiv(n_elems, LANES)
    padded = rows * LANES
    if padded != n_elems:                     # pad only if not lane-aligned
        p_flat = jnp.pad(p_flat, (0, padded - n_elems))
        t_flat = jnp.pad(t_flat, (0, padded - n_elems))
    p2 = p_flat.reshape(rows, LANES)
    t2 = t_flat.reshape(rows, LANES)

    tm_max = _max_tile_rows(dtype)
    num_cores, tiles_per_core, tm, chunk = _plan(rows, row_align, tm_max,
                                                 _num_tensorcores())
    total_tiles = num_cores * tiles_per_core
    needs_mask = (rows % tm) != 0             # only the last tile needs it

    kernel = functools.partial(
        _mixed_loss_kernel, tm=tm, chunk=chunk, n_rows=rows,
        tiles_per_core=tiles_per_core, total_tiles=total_tiles,
        needs_mask=needs_mask)

    def in_map(c, i):
        return (c * tiles_per_core + i, 0)

    itemsize = jnp.dtype(dtype).itemsize
    tile_bytes = tm * LANES * itemsize
    out_bytes = num_cores * 4 * 8 * LANES * 4
    # 2 inputs x 2 pipeline buffers + chunk temporaries + output, + headroom.
    vmem_need = 2 * 2 * tile_bytes + 8 * chunk * LANES * 4 + 2 * out_bytes
    vmem_limit = int(min(48 * 1024 * 1024,
                         max(vmem_need * 3 // 2, 24 * 1024 * 1024)))

    if num_cores > 1:
        dim_sem = (pltpu.CORE_PARALLEL, pltpu.ARBITRARY)
    else:
        dim_sem = (pltpu.ARBITRARY, pltpu.ARBITRARY)

    cost = pl.CostEstimate(
        flops=10 * n_elems, transcendentals=0,
        bytes_accessed=int(2 * rows * LANES * itemsize + out_bytes))

    partials = pl.pallas_call(
        kernel,
        out_shape=jax.ShapeDtypeStruct((num_cores, 4, 8, LANES), jnp.float32),
        grid_spec=pltpu.PrefetchScalarGridSpec(
            num_scalar_prefetch=0,
            grid=(num_cores, tiles_per_core),
            in_specs=[
                pl.BlockSpec((tm, LANES), in_map),
                pl.BlockSpec((tm, LANES), in_map),
            ],
            out_specs=pl.BlockSpec((1, 4, 8, LANES),
                                   lambda c, i: (c, 0, 0, 0)),
        ),
        compiler_params=pltpu.CompilerParams(
            dimension_semantics=dim_sem,
            vmem_limit_bytes=vmem_limit),
        cost_estimate=cost,
    )(p2, t2)

    # Single cross-lane reduce of the lane-dense partials (cheap, in XLA).
    cnt = jnp.sum(partials[:, 0])
    sum_sq_m = jnp.sum(partials[:, 1])
    sum_sq_u = jnp.sum(partials[:, 2])
    max_sq = jnp.max(partials[:, 3])
    return _combine(cnt, sum_sq_m, sum_sq_u, max_sq, n_elems)


@jax.jit
def mixed_loss(pred, true):
    """JAX/Pallas equivalent of MixedLoss.forward(pred, true)."""
    assert pred.shape == true.shape
    if pred.size < SMALL_INPUT_ELEMS:
        return _mixed_loss_small(pred, true)
    return _mixed_loss_pallas(pred, true)


def _reference(pred, true):
    """Pure-JAX reference mirroring the PyTorch semantics."""
    pred = pred.astype(jnp.float32)
    true = true.astype(jnp.float32)
    mask = jnp.abs(true) > 0.5
    cnt = jnp.sum(mask)
    sq = jnp.square(pred - true)
    n = pred.size
    l1a = jnp.sqrt(jnp.sum(jnp.where(mask, sq, 0.0)) / jnp.maximum(cnt, 1))
    l2a = jnp.sqrt(jnp.sum(jnp.where(mask, 0.0, sq)) / jnp.maximum(n - cnt, 1))
    l1b = jnp.sqrt(jnp.mean(sq))
    l2b = jnp.max(jnp.abs(pred - true))
    return jnp.where(cnt > 200, 0.7 * l1a + 0.3 * l2a, 0.7 * l1b + 0.3 * l2b)


if __name__ == "__main__":
    key = jax.random.PRNGKey(0)
    k1, k2, k3, k4, k5, k6 = jax.random.split(key, 6)

    pallas_fn = jax.jit(_mixed_loss_pallas)   # force the kernel path in tests

    # 1) Small CNN-shaped input (NCHW), forced through the Pallas kernel.
    pred = jax.random.normal(k1, (2, 4, 16, 16), dtype=jnp.float32)
    true = jax.random.normal(k2, (2, 4, 16, 16), dtype=jnp.float32)
    out = jax.block_until_ready(pallas_fn(pred, true))
    ref = _reference(pred, true)
    assert jnp.allclose(out, ref, rtol=1e-5, atol=1e-5), (out, ref)

    # 2) Exercise the other branch (few masked elements -> count <= 200).
    true_small = true * 0.01
    out2 = jax.block_until_ready(pallas_fn(pred, true_small))
    ref2 = _reference(pred, true_small)
    assert jnp.allclose(out2, ref2, rtol=1e-5, atol=1e-5), (out2, ref2)

    # 3) Multi-tile input through the dispatcher: covers the tail-masked tile
    #    and, on multi-TC chips, the balanced CORE_PARALLEL split.
    pred_big = jax.random.normal(k3, (8, 18, 64, 64), dtype=jnp.float32)
    true_big = jax.random.normal(k4, (8, 18, 64, 64), dtype=jnp.float32)
    out3 = jax.block_until_ready(mixed_loss(pred_big, true_big))
    ref3 = _reference(pred_big, true_big)
    assert jnp.allclose(out3, ref3, rtol=1e-4, atol=1e-5), (out3, ref3)

    # 4) Ragged size (not a multiple of 128): pad + boundary-row masking.
    pred_r = jax.random.normal(k5, (3, 5, 7, 11), dtype=jnp.float32)
    true_r = jax.random.normal(k6, (3, 5, 7, 11), dtype=jnp.float32)
    out4 = jax.block_until_ready(pallas_fn(pred_r, true_r))
    ref4 = _reference(pred_r, true_r)
    assert jnp.allclose(out4, ref4, rtol=1e-5, atol=1e-5), (out4, ref4)

    # 5) bf16 streaming path (native-dtype mask compare, 16-row alignment).
    pred_h = pred.astype(jnp.bfloat16)
    true_h = true.astype(jnp.bfloat16)
    out5 = jax.block_until_ready(pallas_fn(pred_h, true_h))
    ref5 = _reference(pred_h, true_h)
    assert jnp.allclose(out5, ref5, rtol=1e-3, atol=1e-3), (out5, ref5)

    # 6) Small-input dispatch (pure-JAX path) still matches.
    out6 = jax.block_until_ready(mixed_loss(pred, true))
    assert jnp.allclose(out6, ref, rtol=1e-5, atol=1e-5), (out6, ref)

    print("KERNEL_OK")
</pallas_src>

<mosaic_0001>
module attributes {stable_mosaic.version = 11 : i64} {
  func.func @_mixed_loss_kernel(%arg0: i32, %arg1: i32, %arg2: memref<16x128xf32, #tpu.memory_space<vmem>>, %arg3: memref<16x128xf32, #tpu.memory_space<vmem>>, %arg4: memref<1x4x8x128xf32, #tpu.memory_space<vmem>>) attributes {dimension_semantics = [#tpu.dimension_semantics<arbitrary>, #tpu.dimension_semantics<arbitrary>], iteration_bounds = array<i64: 1, 1>, scalar_prefetch = 0 : i64, scratch_operands = 0 : i64, tpu.core_type = #tpu.core_type<tc>, window_params = [{transform_indices = @transform_0, window_bounds = array<i64: 16, 128>}, {transform_indices = @transform_1, window_bounds = array<i64: 16, 128>}, {transform_indices = @transform_2, window_bounds = array<i64: 1, 4, 8, 128>}]} {
    %c0_i32 = arith.constant 0 : i32
    %0 = arith.cmpi eq, %arg1, %c0_i32 : i32
    %1 = arith.extui %0 : i1 to i32
    %c0_i32_0 = arith.constant 0 : i32
    %2 = arith.cmpi ne, %1, %c0_i32_0 : i32
    scf.if %2 {
      %cst_41 = arith.constant 0.000000e+00 : f32
      %49 = vector.broadcast %cst_41 : f32 to vector<1x4x8x128xf32>
      %c0_42 = arith.constant 0 : index
      %c0_43 = arith.constant 0 : index
      %c0_44 = arith.constant 0 : index
      %c0_45 = arith.constant 0 : index
      %50 = vector.load %arg4[%c0_42, %c0_43, %c0_44, %c0_45] : memref<1x4x8x128xf32, #tpu.memory_space<vmem>>, vector<1x4x8x128xf32>
      tpu.vector_store %arg4[%c0_42, %c0_43, %c0_44, %c0_45], %49 {strides = array<i32>} : memref<1x4x8x128xf32, #tpu.memory_space<vmem>>, vector<1x4x8x128xf32>,
    } else {
    }
    %c0 = arith.constant 0 : index
    %c0_1 = arith.constant 0 : index
    %3 = vector.load %arg2[%c0, %c0_1] : memref<16x128xf32, #tpu.memory_space<vmem>>, vector<16x128xf32>
    %c0_2 = arith.constant 0 : index
    %c0_3 = arith.constant 0 : index
    %4 = vector.load %arg3[%c0_2, %c0_3] : memref<16x128xf32, #tpu.memory_space<vmem>>, vector<16x128xf32>
    %5 = math.absf %4 : vector<16x128xf32>
    %cst = arith.constant 5.000000e-01 : f32
    %6 = vector.broadcast %cst : f32 to vector<16x128xf32>
    %7 = arith.cmpf ogt, %5, %6 : vector<16x128xf32>
    %8 = arith.subf %3, %4 : vector<16x128xf32>
    %9 = arith.mulf %8, %8 : vector<16x128xf32>
    %c0_4 = arith.constant 0 : index
    %c0_5 = arith.constant 0 : index
    %c0_6 = arith.constant 0 : index
    %c0_7 = arith.constant 0 : index
    %10 = vector.load %arg4[%c0_4, %c0_5, %c0_6, %c0_7] : memref<1x4x8x128xf32, #tpu.memory_space<vmem>>, vector<1x1x8x128xf32>
    %11 = vector.shape_cast %10 : vector<1x1x8x128xf32> to vector<8x128xf32>
    %cst_8 = arith.constant 1.000000e+00 : f32
    %cst_9 = arith.constant 0.000000e+00 : f32
    %12 = vector.broadcast %cst_8 : f32 to vector<16x128xf32>
    %13 = vector.broadcast %cst_9 : f32 to vector<16x128xf32>
    %14 = arith.select %7, %12, %13 : vector<16x128xi1>, vector<16x128xf32>
    %15 = vector.shape_cast %14 : vector<16x128xf32> to vector<2x8x128xf32>
    %cst_10 = arith.constant dense<0.000000e+00> : vector<8x128xf32>
    %16 = vector.multi_reduction <add>, %15, %cst_10 [0] : vector<2x8x128xf32> to vector<8x128xf32>
    %17 = arith.addf %11, %16 : vector<8x128xf32>
    %c0_11 = arith.constant 0 : index
    %c0_12 = arith.constant 0 : index
    %c0_13 = arith.constant 0 : index
    %c0_14 = arith.constant 0 : index
    %18 = vector.load %arg4[%c0_11, %c0_12, %c0_13, %c0_14] : memref<1x4x8x128xf32, #tpu.memory_space<vmem>>, vector<1x1x8x128xf32>
    %19 = vector.shape_cast %18 : vector<1x1x8x128xf32> to vector<8x128xf32>
    %20 = vector.shape_cast %17 : vector<8x128xf32> to vector<1x1x8x128xf32>
    tpu.vector_store %arg4[%c0_11, %c0_12, %c0_13, %c0_14], %20 {strides = array<i32>} : memref<1x4x8x128xf32, #tpu.memory_space<vmem>>, vector<1x1x8x128xf32>,
    %c0_15 = arith.constant 0 : index
    %c1 = arith.constant 1 : index
    %c0_16 = arith.constant 0 : index
    %c0_17 = arith.constant 0 : index
    %21 = vector.load %arg4[%c0_15, %c1, %c0_16, %c0_17] : memref<1x4x8x128xf32, #tpu.memory_space<vmem>>, vector<1x1x8x128xf32>
    %22 = vector.shape_cast %21 : vector<1x1x8x128xf32> to vector<8x128xf32>
    %cst_18 = arith.constant 0.000000e+00 : f32
    %23 = vector.broadcast %cst_18 : f32 to vector<16x128xf32>
    %24 = arith.select %7, %9, %23 : vector<16x128xi1>, vector<16x128xf32>
    %25 = vector.shape_cast %24 : vector<16x128xf32> to vector<2x8x128xf32>
    %cst_19 = arith.constant dense<0.000000e+00> : vector<8x128xf32>
    %26 = vector.multi_reduction <add>, %25, %cst_19 [0] : vector<2x8x128xf32> to vector<8x128xf32>
    %27 = arith.addf %22, %26 : vector<8x128xf32>
    %c0_20 = arith.constant 0 : index
    %c1_21 = arith.constant 1 : index
    %c0_22 = arith.constant 0 : index
    %c0_23 = arith.constant 0 : index
    %28 = vector.load %arg4[%c0_20, %c1_21, %c0_22, %c0_23] : memref<1x4x8x128xf32, #tpu.memory_space<vmem>>, vector<1x1x8x128xf32>
    %29 = vector.shape_cast %28 : vector<1x1x8x128xf32> to vector<8x128xf32>
    %30 = vector.shape_cast %27 : vector<8x128xf32> to vector<1x1x8x128xf32>
    tpu.vector_store %arg4[%c0_20, %c1_21, %c0_22, %c0_23], %30 {strides = array<i32>} : memref<1x4x8x128xf32, #tpu.memory_space<vmem>>, vector<1x1x8x128xf32>,
    %c0_24 = arith.constant 0 : index
    %c2 = arith.constant 2 : index
    %c0_25 = arith.constant 0 : index
    %c0_26 = arith.constant 0 : index
    %31 = vector.load %arg4[%c0_24, %c2, %c0_25, %c0_26] : memref<1x4x8x128xf32, #tpu.memory_space<vmem>>, vector<1x1x8x128xf32>
    %32 = vector.shape_cast %31 : vector<1x1x8x128xf32> to vector<8x128xf32>
    %cst_27 = arith.constant 0.000000e+00 : f32
    %33 = vector.broadcast %cst_27 : f32 to vector<16x128xf32>
    %34 = arith.select %7, %33, %9 : vector<16x128xi1>, vector<16x128xf32>
    %35 = vector.shape_cast %34 : vector<16x128xf32> to vector<2x8x128xf32>
    %cst_28 = arith.constant dense<0.000000e+00> : vector<8x128xf32>
    %36 = vector.multi_reduction <add>, %35, %cst_28 [0] : vector<2x8x128xf32> to vector<8x128xf32>
    %37 = arith.addf %32, %36 : vector<8x128xf32>
    %c0_29 = arith.constant 0 : index
    %c2_30 = arith.constant 2 : index
    %c0_31 = arith.constant 0 : index
    %c0_32 = arith.constant 0 : index
    %38 = vector.load %arg4[%c0_29, %c2_30, %c0_31, %c0_32] : memref<1x4x8x128xf32, #tpu.memory_space<vmem>>, vector<1x1x8x128xf32>
    %39 = vector.shape_cast %38 : vector<1x1x8x128xf32> to vector<8x128xf32>
    %40 = vector.shape_cast %37 : vector<8x128xf32> to vector<1x1x8x128xf32>
    tpu.vector_store %arg4[%c0_29, %c2_30, %c0_31, %c0_32], %40 {strides = array<i32>} : memref<1x4x8x128xf32, #tpu.memory_space<vmem>>, vector<1x1x8x128xf32>,
    %c0_33 = arith.constant 0 : index
    %c3 = arith.constant 3 : index
    %c0_34 = arith.constant 0 : index
    %c0_35 = arith.constant 0 : index
    %41 = vector.load %arg4[%c0_33, %c3, %c0_34, %c0_35] : memref<1x4x8x128xf32, #tpu.memory_space<vmem>>, vector<1x1x8x128xf32>
    %42 = vector.shape_cast %41 : vector<1x1x8x128xf32> to vector<8x128xf32>
    %43 = vector.shape_cast %9 : vector<16x128xf32> to vector<2x8x128xf32>
    %cst_36 = arith.constant dense<0xFF800000> : vector<8x128xf32>
    %44 = vector.multi_reduction <maximumf>, %43, %cst_36 [0] : vector<2x8x128xf32> to vector<8x128xf32>
    %45 = arith.maximumf %42, %44 : vector<8x128xf32>
    %c0_37 = arith.constant 0 : index
    %c3_38 = arith.constant 3 : index
    %c0_39 = arith.constant 0 : index
    %c0_40 = arith.constant 0 : index
    %46 = vector.load %arg4[%c0_37, %c3_38, %c0_39, %c0_40] : memref<1x4x8x128xf32, #tpu.memory_space<vmem>>, vector<1x1x8x128xf32>
    %47 = vector.shape_cast %46 : vector<1x1x8x128xf32> to vector<8x128xf32>
    %48 = vector.shape_cast %45 : vector<8x128xf32> to vector<1x1x8x128xf32>
    tpu.vector_store %arg4[%c0_37, %c3_38, %c0_39, %c0_40], %48 {strides = array<i32>} : memref<1x4x8x128xf32, #tpu.memory_space<vmem>>, vector<1x1x8x128xf32>,
    return
  }
  func.func @transform_0(%arg0: i32, %arg1: i32) -> (i32, i32) {
    %c1_i32 = arith.constant 1 : i32
    %0 = arith.muli %arg0, %c1_i32 : i32
    %1 = arith.addi %0, %arg1 : i32
    %c0_i32 = arith.constant 0 : i32
    %c0_i32_0 = arith.constant 0 : i32
    return %1, %c0_i32 : i32, i32
  }
  func.func @transform_1(%arg0: i32, %arg1: i32) -> (i32, i32) {
    %c1_i32 = arith.constant 1 : i32
    %0 = arith.muli %arg0, %c1_i32 : i32
    %1 = arith.addi %0, %arg1 : i32
    %c0_i32 = arith.constant 0 : i32
    %c0_i32_0 = arith.constant 0 : i32
    return %1, %c0_i32 : i32, i32
  }
  func.func @transform_2(%arg0: i32, %arg1: i32) -> (i32, i32, i32, i32) {
    %c0_i32 = arith.constant 0 : i32
    %c0_i32_0 = arith.constant 0 : i32
    %c0_i32_1 = arith.constant 0 : i32
    %c0_i32_2 = arith.constant 0 : i32
    return %arg0, %c0_i32, %c0_i32_0, %c0_i32_1 : i32, i32, i32, i32
  }
}

</mosaic_0001>

<llo_original>
// kernel: _mixed_loss_pallas.1
$region0: #{_mixed_loss_pallas.1}
  #allocation0 [shape = 'u32[]', space=smem, size = 0x4, offset = 0x4, fixed_abs, tag = 'smem constant byte address 0x4 - core index']
  #allocation1 [shape = 'u32[144,128]{1,0:T(1,128)}', space=vmem, size = 0x12000, scoped, tag = 'internal scratch']
  %s0 = inlined_call_operand.vmem [shape: f32[16,128], index: 0, kind: input, shape index: {}]
  %s1 = inlined_call_operand.vmem [shape: f32[16,128], index: 1, kind: input, shape index: {}]
  %s2 = inlined_call_operand.vmem [shape: f32[1,4,8,128], index: 2, kind: output, shape index: {}]
  %s3 = sld [smem:[#allocation0]]
  $region22: #{_mixed_loss_pallas.1} parent=0
    _
  %s5 = ssub.s32 1, %s3
  %s6 = scalar_select 0, %s5, %s3
  // Predicated region
  $region2: #{_mixed_loss_pallas.1} parent=0 // pred_check
    _
  $region3: #{_mixed_loss_pallas.1} parent=0 // pred_check_branch
    %8 = sbr.rel (0) target = $region5
  $region4: #{_mixed_loss_pallas.1} parent=0 // pred_region
    %s9 = sadd.s32 0, 0
    %s10 = smul.u32 2, %s9
    %p11 = scmp.lt.s32.totalorder %s10, 1
    %s12 = scalar_select %p11, %s10, 1
    %s13 = smul.addr %s12, 8
    %s14 = scalar_lea.vmem %s0, %s13
    %s15 = sadd.s32 0, 0
    %s16 = smul.u32 2, %s15
  $region5: #{_mixed_loss_pallas.1} parent=0 // pred_fallthru
    _
  // Predicated region
  $region6: #{_mixed_loss_pallas.1} parent=0 // pred_check
    _
  $region7: #{_mixed_loss_pallas.1} parent=0 // pred_check_branch
    %18 = sbr.rel (0) target = $region9
  $region8: #{_mixed_loss_pallas.1} parent=0 // pred_region
    %s19 = sadd.s32 0, 0
    %s20 = smul.u32 2, %s19
    %p21 = scmp.lt.s32.totalorder %s20, 1
    %s22 = scalar_select %p21, %s20, 1
    %s23 = smul.addr %s22, 8
    %s24 = scalar_lea.vmem %s1, %s23
    %s25 = sadd.s32 0, 0
    %s26 = smul.u32 2, %s25
  $region9: #{_mixed_loss_pallas.1} parent=0 // pred_fallthru
    _
  %s27 = sadd.s32 0, 0
  %s28 = smul.u32 2, %s27
  %p29 = scmp.lt.s32.totalorder %s28, 1
  %s30 = scalar_select %p29, %s28, 1
  %s31 = smul.addr %s30, 8
  %s32 = scalar_lea.vmem %s0, %s31
  %s33 = sadd.s32 0, 0
  %s34 = smul.u32 2, %s33
  %p35 = scmp.lt.s32.totalorder %s34, 1
  %s36 = scalar_select %p35, %s34, 1
  %s37 = smul.addr %s36, 8
  %s38 = scalar_lea.vmem %s1, %s37
  %s39 = sadd.s32 0, 0
  %s40 = smul.u32 2, %s39
  %p41 = scmp.lt.s32.totalorder %s40, 1
  %s42 = scalar_select %p41, %s40, 1
  %s43 = smul.addr %s42, 8
  %s44 = scalar_lea.vmem %s0, %s43
  %s45 = sadd.s32 0, 0
  %s46 = smul.u32 2, %s45
  %s47 = sadd.s32 0, 0
  %s48 = smul.u32 2, %s47
  %p49 = scmp.lt.s32.totalorder %s48, 1
  %s50 = scalar_select %p49, %s48, 1
  %s51 = smul.addr %s50, 8
  %s52 = scalar_lea.vmem %s1, %s51
  %s53 = sadd.s32 0, 0
  %s54 = smul.u32 2, %s53
  %p55 = scmp.eq.s32.totalorder 0, 0
  // Predicated region
  $region10: #{_mixed_loss_pallas.1} parent=0 // pred_check
    %p56 = pneg %p55
  $region11: #{_mixed_loss_pallas.1} parent=0 // pred_check_branch
    %58 = sbr.rel (%p56) target = $region13
  $region12: #{_mixed_loss_pallas.1} parent=0 // pred_region
    %59 = vst [vmem:[%s2] sm:$0xff] 0.0
    %60 = vst [vmem:[%s2 + $0x8] sm:$0xff] 0.0
    %61 = vst [vmem:[%s2 + $0x10] sm:$0xff] 0.0
    %62 = vst [vmem:[%s2 + $0x18] sm:$0xff] 0.0
  $region13: #{_mixed_loss_pallas.1} parent=0 // pred_fallthru
    _
  %v63 = vld [vmem:[%s44] sm:$0xff]
  %v64 = vld [vmem:[%s44 + $0x8] sm:$0xff]
  %v65 = vld [vmem:[%s52] sm:$0xff]
  %v66 = vld [vmem:[%s52 + $0x8] sm:$0xff]
  %v67 = vand.u32 2147483647, %v65
  %v68 = vand.u32 2147483647, %v66
  %vm69 = vcmp.gt.f32.partialorder %v67, 0.5
  %vm70 = vcmp.gt.f32.partialorder %v68, 0.5
  %v71 = vsub.f32 %v63, %v65
  %v72 = vsub.f32 %v64, %v66
  %v73 = vmul.f32 %v71, %v71
  %v74 = vmul.f32 %v72, %v72
  %v75 = vld [vmem:[%s2] sm:$0xff]
  %v76 = vsel %vm69, 1.0, 0.0
  %v77 = vsel %vm70, 1.0, 0.0
  %v78 = vadd.f32 %v76, %v77
  %v79 = vadd.f32 %v75, %v78
  %80 = vst [vmem:[%s2] sm:$0xff] %v79
  %s81 = scalar_lea.vmem %s2, 8
  %v82 = vld [vmem:[%s81] sm:$0xff]
  %v83 = vsel %vm69, %v73, 0.0
  %v84 = vsel %vm70, %v74, 0.0
  %v85 = vadd.f32 %v83, %v84
  %v86 = vadd.f32 %v82, %v85
  %87 = vst [vmem:[%s81] sm:$0xff] %v86
  %s88 = scalar_lea.vmem %s2, 16
  %v89 = vld [vmem:[%s88] sm:$0xff]
  %v90 = vsel %vm69, 0.0, %v73
  %v91 = vsel %vm70, 0.0, %v74
  %v92 = vadd.f32 %v90, %v91
  %v93 = vadd.f32 %v89, %v92
  %94 = vst [vmem:[%s88] sm:$0xff] %v93
  %s95 = scalar_lea.vmem %s2, 24
  %v96 = vld [vmem:[%s95] sm:$0xff]
  %v97 = vmax.f32 %v73, %v74
  %v98 = vmax.f32 %v96, %v97
  %99 = vst [vmem:[%s95] sm:$0xff] %v98
  // Predicated region
  $region14: #{_mixed_loss_pallas.1} parent=0 // pred_check
    _
  $region15: #{_mixed_loss_pallas.1} parent=0 // pred_check_branch
    %101 = sbr.rel (0) target = $region17
  $region16: #{_mixed_loss_pallas.1} parent=0 // pred_region
    _
  $region17: #{_mixed_loss_pallas.1} parent=0 // pred_fallthru
    _
  // Predicated region
  $region18: #{_mixed_loss_pallas.1} parent=0 // pred_check
    _
  $region19: #{_mixed_loss_pallas.1} parent=0 // pred_check_branch
    %103 = sbr.rel (0) target = $region21
  $region20: #{_mixed_loss_pallas.1} parent=0 // pred_region
    _
  $region21: #{_mixed_loss_pallas.1} parent=0 // pred_fallthru
    _

</llo_original>
